<compile_context>
chip_gen: v6e
topology: v6e:2x2x1
jax: 0.10.0
libtpu: 0.0.40
codegen_flags: <defaults>
</compile_context>

<pallas_src>
import jax
import jax.numpy as jnp
from jax.experimental import pallas as pl
from jax.experimental.pallas import tpu as pltpu

# ---- small demo config (consistent with the module's __init__ signature) ----
EMBED_DIM = 32
HIDDEN_DIM = 64
NUM_CHANNELS = 4
NUM_HEADS = 4          # accepted by __init__ but unused by the conv block
NUM_LAYERS = 1         # reference forward hard-codes range(1)
NUM_CLASSES = 10
PATCH = 4
IMG = 16
NUM_PATCHES = (IMG // PATCH) ** 2       # 16
BATCH = 2
SEQ = NUM_PATCHES + 1                   # +1 cls token
LN_EPS = 1e-5

PATCH_DIM = NUM_CHANNELS * PATCH * PATCH   # 64: flattened patch length
NROWS = SEQ * BATCH                        # 34 real token rows (seq-major)
NPAD = ((NROWS + 7) // 8) * 8              # 40: padded to a sublane multiple

SLAB_LANES = 128

# ---- bf16 weight slab (all row offsets are multiples of 16 = bf16 sublanes) --
RW_PATCH = 0                               # (PATCH_DIM, E)   rows   0: 64
RW_CONV = RW_PATCH + PATCH_DIM             # (E, 3E) folded   rows  64: 96
RW_MLP1 = RW_CONV + EMBED_DIM              # (E, H)  folded   rows  96:128
RW_MLP2 = RW_MLP1 + EMBED_DIM              # (H, E)           rows 128:192
RW_HEAD = RW_MLP2 + HIDDEN_DIM             # (E, 128) folded  rows 192:224
W_ROWS = RW_HEAD + EMBED_DIM               # 224

# ---- f32 vector slab (fused biases + cls/pos-enc/patch-bias additive rows) --
RV_BIAS = 0                                # 4 fused bias rows (+4 zero pad)
RV_ADD = 8                                 # (NPAD, E) additive rows
V_ROWS = RV_ADD + NPAD                     # 48

HEAD_ROWS = 8        # >= BATCH, sublane-aligned row block fed to the head
OUT_LANES = 128      # lane-dense output tile; wrapper slices to NUM_CLASSES
assert BATCH <= HEAD_ROWS <= NPAD


def _ln_raw(x):
    # LayerNorm without affine (gamma/beta folded into downstream matmuls).
    # var = E[x^2] - mu^2: the two cross-lane reductions are independent so
    # their XLU pushes overlap.  Kept in f32 (cancellation-safe over 32 lanes).
    mu = jnp.mean(x, axis=-1, keepdims=True)
    ms = jnp.mean(x * x, axis=-1, keepdims=True)
    return (x - mu) * jax.lax.rsqrt(ms - mu * mu + LN_EPS)


def convformer_kernel(patches_ref, w_ref, v_ref, out_ref):
    f32, bf16 = jnp.float32, jnp.bfloat16
    E, H = EMBED_DIM, HIDDEN_DIM

    # ---- static views into the packed slabs (no extra DMAs) -----------------
    w_patch = w_ref[RW_PATCH:RW_PATCH + PATCH_DIM, 0:E]          # bf16
    w_conv = w_ref[RW_CONV:RW_CONV + E, 0:3 * E]                 # [Wp|Wc|Wn], LN1 folded
    w_mlp1 = w_ref[RW_MLP1:RW_MLP1 + E, 0:H]                     # LN2 folded
    w_mlp2 = w_ref[RW_MLP2:RW_MLP2 + H, 0:E]
    w_head = w_ref[RW_HEAD:RW_HEAD + E, 0:OUT_LANES]             # LNh folded, lane-padded

    b_conv_all = v_ref[RV_BIAS + 0:RV_BIAS + 1, 0:3 * E]         # f32 fused biases
    b_mlp1 = v_ref[RV_BIAS + 1:RV_BIAS + 2, 0:H]
    b_mlp2 = v_ref[RV_BIAS + 2:RV_BIAS + 3, 0:E]
    b_head = v_ref[RV_BIAS + 3:RV_BIAS + 4, 0:OUT_LANES]
    add_rows = v_ref[RV_ADD:RV_ADD + NPAD, 0:E]                  # cls+pe / pe+b_patch

    # 1) patch embedding + cls token + positional encodings: ONE bf16 matmul
    #    (f32 accumulate) + ONE f32 add (cls/pe/b_patch pre-folded per row).
    x = jnp.dot(patches_ref[...], w_patch, preferred_element_type=f32) + add_rows

    # 2a) token mixer: pre-LN + Conv1d(k=3, pad=1) along the sequence fused
    #     into a single (NPAD, E) @ (E, 3E) matmul.  The +/-1-token shifts
    #     (sequence stride = BATCH rows) are sublane rotations (XLU) of the
    #     prev/next 32-lane slices, with a broadcasted_iota row mask supplying
    #     the zero sequence-boundary padding (no concat materialization).
    #     NOTE(v6e): if a bundle dump shows lane-rotate pressure from the
    #     32/64-lane-offset extracts below, pad each W_k block to a 128-lane
    #     column offset (N=384) on v6e/v7x only (keep N=96 on v5e).
    y = _ln_raw(x).astype(bf16)
    p_all = jnp.dot(y, w_conv, preferred_element_type=f32) + b_conv_all  # (NPAD, 3E)
    p_prev = p_all[:, 0:E]
    p_curr = p_all[:, E:2 * E]
    p_next = p_all[:, 2 * E:3 * E]
    rid = jax.lax.broadcasted_iota(jnp.int32, (NPAD, E), 0)
    prev_sh = jnp.where(rid >= BATCH,
                        pltpu.roll(p_prev, shift=BATCH, axis=0), 0.0)
    next_sh = jnp.where(rid < NROWS - BATCH,
                        pltpu.roll(p_next, shift=NPAD - BATCH, axis=0), 0.0)
    x = x + prev_sh + p_curr + next_sh

    # 2b) pre-LN + GELU MLP (tanh GELU -> EUP; PyTorch default is exact erf).
    y2 = _ln_raw(x).astype(bf16)
    h = jnp.dot(y2, w_mlp1, preferred_element_type=f32) + b_mlp1
    h = jax.nn.gelu(h, approximate=True).astype(bf16)
    x = x + jnp.dot(h, w_mlp2, preferred_element_type=f32) + b_mlp2

    # 3) head on the first HEAD_ROWS (>= BATCH cls rows): LN + Linear into a
    #    lane-dense (8, 128) tile; the wrapper slices [:BATCH, :NUM_CLASSES].
    cn = _ln_raw(x[0:HEAD_ROWS, :]).astype(bf16)
    out_ref[...] = jnp.dot(cn, w_head, preferred_element_type=f32) + b_head


# ----------------------------- JAX-side glue --------------------------------
def extract_patches(x):
    """NCHW -> (NUM_PATCHES*B, C*p*p), rows seq-major, patch vec order (c,i,j)."""
    B, C, Hh, Ww = x.shape
    Hp, Wp = Hh // PATCH, Ww // PATCH
    t = x.reshape(B, C, Hp, PATCH, Wp, PATCH)
    t = jnp.transpose(t, (2, 4, 0, 1, 3, 5))       # (Hp, Wp, B, C, p, p)
    return t.reshape(Hp * Wp * B, C * PATCH * PATCH)


def build_patch_matrix(x):
    """(NPAD, PATCH_DIM) bf16: BATCH zero rows (cls slots), patches, pad rows."""
    patches = extract_patches(x)
    patches = jnp.pad(patches, ((BATCH, NPAD - NROWS), (0, 0)))
    return patches.astype(jnp.bfloat16)            # MXU operand; weights also bf16


def pack_params(p):
    """Build the two parameter slabs ONCE at init (hoisted off the hot path).

    Returns (wslab bf16 (224,128), vslab f32 (48,128)).  LayerNorm affines are
    folded into the downstream matmul weights / biases here, exactly.
    """
    f32 = jnp.float32

    def lanes(a, dtype):
        a = a.astype(f32)
        a = jnp.pad(a, ((0, 0), (0, SLAB_LANES - a.shape[1])))
        return a.astype(dtype)

    g1, be1 = p["g1"], p["be1"]
    g2, be2 = p["g2"], p["be2"]
    gh, bh = p["gh"], p["bh"]

    # NOTE: p["w_conv"][k] is W_k^T with shape (E_in, E_out); real PyTorch
    # Conv1d weights (E_out, E_in, 3) must be permuted/transposed before use.
    # Fold LN1 gamma into the conv weights, LN1 beta (+conv bias) into biases.
    w_conv_cat = jnp.concatenate(
        [g1.T * p["w_conv"][0], g1.T * p["w_conv"][1], g1.T * p["w_conv"][2]],
        axis=1)                                                     # (E, 3E)
    b_conv_all = jnp.concatenate(
        [be1 @ p["w_conv"][0],
         be1 @ p["w_conv"][1] + p["b_conv"],
         be1 @ p["w_conv"][2]], axis=1)                             # (1, 3E)
    # Fold LN2 into the first MLP matmul, LNh into the classifier head.
    w_mlp1_f = g2.T * p["w_mlp1"]
    b_mlp1_f = be2 @ p["w_mlp1"] + p["b_mlp1"]                      # (1, H)
    w_head_f = gh.T * p["w_head"]
    b_head_f = bh @ p["w_head"] + p["b_head"]                       # (1, C)

    wslab = jnp.concatenate(
        [lanes(p["w_patch"], jnp.bfloat16),
         lanes(w_conv_cat, jnp.bfloat16),
         lanes(w_mlp1_f, jnp.bfloat16),
         lanes(p["w_mlp2"], jnp.bfloat16),
         lanes(w_head_f, jnp.bfloat16)], axis=0)
    assert wslab.shape == (W_ROWS, SLAB_LANES), wslab.shape

    bias_block = jnp.concatenate(
        [lanes(b_conv_all, f32), lanes(b_mlp1_f, f32), lanes(p["b_mlp2"], f32),
         lanes(b_head_f, f32), jnp.zeros((4, SLAB_LANES), f32)], axis=0)  # (8,128)

    # additive rows: row r = s*BATCH + b gets cls+pe[0] (s==0) or pe[s]+b_patch.
    add = jnp.repeat(p["pe"], BATCH, axis=0)                        # (NROWS, E)
    add = add.at[:BATCH].add(p["cls"])
    add = add.at[BATCH:].add(p["b_patch"])
    add = jnp.pad(add, ((0, NPAD - NROWS), (0, 0)))                 # (NPAD, E)

    vslab = jnp.concatenate([bias_block, lanes(add, f32)], axis=0)
    assert vslab.shape == (V_ROWS, SLAB_LANES), vslab.shape
    return wslab, vslab


def convformer_forward(x, wslab, vslab):
    """Per-call path: patch extraction + one grid-less pallas_call."""
    patches = build_patch_matrix(x)
    vmem = pl.BlockSpec(memory_space=pltpu.MemorySpace.VMEM)
    # No grid: the whole 40-row problem (< 100 KiB resident) fits in VMEM on
    # v5e/v6e/v7x with huge margin; 3 input DMAs (patches + 2 slabs) total.
    out = pl.pallas_call(
        convformer_kernel,
        out_shape=jax.ShapeDtypeStruct((HEAD_ROWS, OUT_LANES), jnp.float32),
        in_specs=[vmem, vmem, vmem],
        out_specs=vmem,
    )(patches, wslab, vslab)
    return out[:BATCH, :NUM_CLASSES]


def make_params(key):
    ks = jax.random.split(key, 12)
    def rnd(k, shape, scale=0.02):
        return (scale * jax.random.normal(k, shape)).astype(jnp.float32)
    ones = lambda s: jnp.ones(s, jnp.float32)
    zeros = lambda s: jnp.zeros(s, jnp.float32)
    return dict(
        # patch embedding Conv2d(num_channels, embed_dim, patch, patch)
        w_patch=rnd(ks[0], (PATCH_DIM, EMBED_DIM)),
        b_patch=rnd(ks[1], (1, EMBED_DIM)),
        # cls token ~ randn, positional encodings = zeros (as in __init__)
        cls=jax.random.normal(ks[2], (1, EMBED_DIM)).astype(jnp.float32),
        pe=zeros((SEQ, EMBED_DIM)),
        # block: LN1, Conv1d(E, E, 3) token mixer
        g1=ones((1, EMBED_DIM)), be1=zeros((1, EMBED_DIM)),
        w_conv=rnd(ks[3], (3, EMBED_DIM, EMBED_DIM)),   # [k] is W_k^T (E_in, E_out)
        b_conv=rnd(ks[4], (1, EMBED_DIM)),
        # block: LN2, MLP
        g2=ones((1, EMBED_DIM)), be2=zeros((1, EMBED_DIM)),
        w_mlp1=rnd(ks[5], (EMBED_DIM, HIDDEN_DIM)), b_mlp1=rnd(ks[6], (1, HIDDEN_DIM)),
        w_mlp2=rnd(ks[7], (HIDDEN_DIM, EMBED_DIM)), b_mlp2=rnd(ks[8], (1, EMBED_DIM)),
        # head: LN + Linear(E, num_classes)
        gh=ones((1, EMBED_DIM)), bh=zeros((1, EMBED_DIM)),
        w_head=rnd(ks[9], (EMBED_DIM, NUM_CLASSES)), b_head=rnd(ks[10], (1, NUM_CLASSES)),
    )


def reference_forward(x, p):
    """Pure-JAX f32 reference in UNFOLDED form (independently checks the
    slab packing, LN-affine folding and the shift/mask logic)."""
    B = x.shape[0]
    patches = extract_patches(x)
    emb = patches @ p["w_patch"] + p["b_patch"]
    cls_rows = jnp.broadcast_to(p["cls"], (B, EMBED_DIM))
    xx = jnp.concatenate([cls_rows, emb], axis=0) + jnp.repeat(p["pe"], B, axis=0)

    def ln(v, g, b):
        mu = v.mean(-1, keepdims=True)
        var = ((v - mu) ** 2).mean(-1, keepdims=True)
        return (v - mu) / jnp.sqrt(var + LN_EPS) * g + b

    y = ln(xx, p["g1"], p["be1"])
    z = jnp.zeros((B, EMBED_DIM), jnp.float32)
    yp = jnp.concatenate([z, y[:-B]], 0)
    yn = jnp.concatenate([y[B:], z], 0)
    xx = xx + (yp @ p["w_conv"][0] + y @ p["w_conv"][1] + yn @ p["w_conv"][2]
               + p["b_conv"])
    y2 = ln(xx, p["g2"], p["be2"])
    h = jax.nn.gelu(y2 @ p["w_mlp1"] + p["b_mlp1"], approximate=True)
    xx = xx + h @ p["w_mlp2"] + p["b_mlp2"]
    cls_out = xx[:B]
    return ln(cls_out, p["gh"], p["bh"]) @ p["w_head"] + p["b_head"]


if __name__ == "__main__":
    key = jax.random.PRNGKey(0)
    kx, kp = jax.random.split(key)
    x = jax.random.normal(kx, (BATCH, NUM_CHANNELS, IMG, IMG), jnp.float32)  # NCHW
    params = make_params(kp)

    # Parameter slabs are built exactly once at init (hoisted out of the
    # per-call jitted path); only the patch matrix is rebuilt per forward.
    wslab, vslab = pack_params(params)
    fwd = jax.jit(convformer_forward)

    out = jax.block_until_ready(fwd(x, wslab, vslab))
    ref = jax.block_until_ready(reference_forward(x, params))

    assert out.shape == (BATCH, NUM_CLASSES), out.shape
    # Tolerance sized for bf16 MXU operands with f32 accumulation.
    if not jnp.allclose(out, ref, rtol=3e-2, atol=5e-3):
        raise AssertionError(f"mismatch vs reference:\n{out}\n{ref}")
    print("KERNEL_OK")
</pallas_src>

<mosaic_0001>
module attributes {stable_mosaic.version = 11 : i64} {
  func.func @convformer_kernel(%arg0: memref<40x64xbf16, #tpu.memory_space<vmem>>, %arg1: memref<224x128xbf16, #tpu.memory_space<vmem>>, %arg2: memref<48x128xf32, #tpu.memory_space<vmem>>, %arg3: memref<8x128xf32, #tpu.memory_space<vmem>>) attributes {dimension_semantics = [], scalar_prefetch = 0 : i64, scratch_operands = 0 : i64, tpu.core_type = #tpu.core_type<tc>} {
    %c0 = arith.constant 0 : index
    %c0_0 = arith.constant 0 : index
    %0 = vector.load %arg1[%c0, %c0_0] : memref<224x128xbf16, #tpu.memory_space<vmem>>, vector<64x32xbf16>
    %c64 = arith.constant 64 : index
    %c0_1 = arith.constant 0 : index
    %1 = vector.load %arg1[%c64, %c0_1] : memref<224x128xbf16, #tpu.memory_space<vmem>>, vector<32x96xbf16>
    %c96 = arith.constant 96 : index
    %c0_2 = arith.constant 0 : index
    %2 = vector.load %arg1[%c96, %c0_2] : memref<224x128xbf16, #tpu.memory_space<vmem>>, vector<32x64xbf16>
    %c128 = arith.constant 128 : index
    %c0_3 = arith.constant 0 : index
    %3 = vector.load %arg1[%c128, %c0_3] : memref<224x128xbf16, #tpu.memory_space<vmem>>, vector<64x32xbf16>
    %c192 = arith.constant 192 : index
    %c0_4 = arith.constant 0 : index
    %4 = vector.load %arg1[%c192, %c0_4] : memref<224x128xbf16, #tpu.memory_space<vmem>>, vector<32x128xbf16>
    %c0_5 = arith.constant 0 : index
    %c0_6 = arith.constant 0 : index
    %5 = vector.load %arg2[%c0_5, %c0_6] : memref<48x128xf32, #tpu.memory_space<vmem>>, vector<1x96xf32>
    %c1 = arith.constant 1 : index
    %c0_7 = arith.constant 0 : index
    %6 = vector.load %arg2[%c1, %c0_7] : memref<48x128xf32, #tpu.memory_space<vmem>>, vector<1x64xf32>
    %c2 = arith.constant 2 : index
    %c0_8 = arith.constant 0 : index
    %7 = vector.load %arg2[%c2, %c0_8] : memref<48x128xf32, #tpu.memory_space<vmem>>, vector<1x32xf32>
    %c3 = arith.constant 3 : index
    %c0_9 = arith.constant 0 : index
    %8 = vector.load %arg2[%c3, %c0_9] : memref<48x128xf32, #tpu.memory_space<vmem>>, vector<1x128xf32>
    %c8 = arith.constant 8 : index
    %c0_10 = arith.constant 0 : index
    %9 = vector.load %arg2[%c8, %c0_10] : memref<48x128xf32, #tpu.memory_space<vmem>>, vector<40x32xf32>
    %c0_11 = arith.constant 0 : index
    %c0_12 = arith.constant 0 : index
    %10 = vector.load %arg0[%c0_11, %c0_12] : memref<40x64xbf16, #tpu.memory_space<vmem>>, vector<40x64xbf16>
    %cst = arith.constant dense<0.000000e+00> : vector<40x32xf32>
    %11 = tpu.matmul %10, %0, %cst {dimension_numbers = #tpu.dot_dimension_numbers<[1], [0], [0], [1], [0, 0, 1, 1], [], []>} : vector<40x64xbf16>, vector<64x32xbf16>, vector<40x32xf32> -> vector<40x32xf32>
    %12 = arith.addf %11, %9 : vector<40x32xf32>
    %cst_13 = arith.constant dense<0.000000e+00> : vector<40xf32>
    %13 = vector.multi_reduction <add>, %12, %cst_13 [1] : vector<40x32xf32> to vector<40xf32>
    %14 = vector.shape_cast %13 : vector<40xf32> to vector<40x1xf32>
    %cst_14 = arith.constant 3.200000e+01 : f32
    %15 = vector.broadcast %cst_14 : f32 to vector<40x1xf32>
    %16 = arith.divf %14, %15 : vector<40x1xf32>
    %17 = arith.mulf %12, %12 : vector<40x32xf32>
    %cst_15 = arith.constant dense<0.000000e+00> : vector<40xf32>
    %18 = vector.multi_reduction <add>, %17, %cst_15 [1] : vector<40x32xf32> to vector<40xf32>
    %19 = vector.shape_cast %18 : vector<40xf32> to vector<40x1xf32>
    %cst_16 = arith.constant 3.200000e+01 : f32
    %20 = vector.broadcast %cst_16 : f32 to vector<40x1xf32>
    %21 = arith.divf %19, %20 : vector<40x1xf32>
    %22 = vector.broadcast %16 : vector<40x1xf32> to vector<40x32xf32>
    %23 = arith.subf %12, %22 : vector<40x32xf32>
    %24 = arith.mulf %16, %16 : vector<40x1xf32>
    %25 = arith.subf %21, %24 : vector<40x1xf32>
    %cst_17 = arith.constant 9.99999974E-6 : f32
    %26 = vector.broadcast %cst_17 : f32 to vector<40x1xf32>
    %27 = arith.addf %25, %26 : vector<40x1xf32>
    %28 = math.rsqrt %27 : vector<40x1xf32>
    %29 = vector.broadcast %28 : vector<40x1xf32> to vector<40x32xf32>
    %30 = arith.mulf %23, %29 : vector<40x32xf32>
    %31 = arith.truncf %30 : vector<40x32xf32> to vector<40x32xbf16>
    %cst_18 = arith.constant dense<0.000000e+00> : vector<40x96xf32>
    %32 = tpu.matmul %31, %1, %cst_18 {dimension_numbers = #tpu.dot_dimension_numbers<[1], [0], [0], [1], [0, 0, 1, 1], [], []>} : vector<40x32xbf16>, vector<32x96xbf16>, vector<40x96xf32> -> vector<40x96xf32>
    %33 = vector.broadcast %5 : vector<1x96xf32> to vector<40x96xf32>
    %34 = arith.addf %32, %33 : vector<40x96xf32>
    %35 = vector.extract_strided_slice %34 {offsets = [0, 0], sizes = [40, 32], strides = [1, 1]} : vector<40x96xf32> to vector<40x32xf32>
    %36 = vector.extract_strided_slice %34 {offsets = [0, 32], sizes = [40, 32], strides = [1, 1]} : vector<40x96xf32> to vector<40x32xf32>
    %37 = vector.extract_strided_slice %34 {offsets = [0, 64], sizes = [40, 32], strides = [1, 1]} : vector<40x96xf32> to vector<40x32xf32>
    %38 = tpu.iota {dimensions = array<i32: 0>} : vector<40x32xi32>
    %c2_i32 = arith.constant 2 : i32
    %39 = vector.broadcast %c2_i32 : i32 to vector<40x32xi32>
    %40 = arith.cmpi sge, %38, %39 : vector<40x32xi32>
    %c2_i32_19 = arith.constant 2 : i32
    %41 = tpu.dynamic_rotate %35 by %c2_i32_19 dim 0 : vector<40x32xf32>, i32 -> vector<40x32xf32>
    %cst_20 = arith.constant 0.000000e+00 : f32
    %42 = vector.broadcast %cst_20 : f32 to vector<40x32xf32>
    %43 = arith.select %40, %41, %42 : vector<40x32xi1>, vector<40x32xf32>
    %c32_i32 = arith.constant 32 : i32
    %44 = vector.broadcast %c32_i32 : i32 to vector<40x32xi32>
    %45 = arith.cmpi slt, %38, %44 : vector<40x32xi32>
    %c38_i32 = arith.constant 38 : i32
    %46 = tpu.dynamic_rotate %37 by %c38_i32 dim 0 : vector<40x32xf32>, i32 -> vector<40x32xf32>
    %cst_21 = arith.constant 0.000000e+00 : f32
    %47 = vector.broadcast %cst_21 : f32 to vector<40x32xf32>
    %48 = arith.select %45, %46, %47 : vector<40x32xi1>, vector<40x32xf32>
    %49 = arith.addf %12, %43 : vector<40x32xf32>
    %50 = arith.addf %49, %36 : vector<40x32xf32>
    %51 = arith.addf %50, %48 : vector<40x32xf32>
    %cst_22 = arith.constant dense<0.000000e+00> : vector<40xf32>
    %52 = vector.multi_reduction <add>, %51, %cst_22 [1] : vector<40x32xf32> to vector<40xf32>
    %53 = vector.shape_cast %52 : vector<40xf32> to vector<40x1xf32>
    %cst_23 = arith.constant 3.200000e+01 : f32
    %54 = vector.broadcast %cst_23 : f32 to vector<40x1xf32>
    %55 = arith.divf %53, %54 : vector<40x1xf32>
    %56 = arith.mulf %51, %51 : vector<40x32xf32>
    %cst_24 = arith.constant dense<0.000000e+00> : vector<40xf32>
    %57 = vector.multi_reduction <add>, %56, %cst_24 [1] : vector<40x32xf32> to vector<40xf32>
    %58 = vector.shape_cast %57 : vector<40xf32> to vector<40x1xf32>
    %cst_25 = arith.constant 3.200000e+01 : f32
    %59 = vector.broadcast %cst_25 : f32 to vector<40x1xf32>
    %60 = arith.divf %58, %59 : vector<40x1xf32>
    %61 = vector.broadcast %55 : vector<40x1xf32> to vector<40x32xf32>
    %62 = arith.subf %51, %61 : vector<40x32xf32>
    %63 = arith.mulf %55, %55 : vector<40x1xf32>
    %64 = arith.subf %60, %63 : vector<40x1xf32>
    %cst_26 = arith.constant 9.99999974E-6 : f32
    %65 = vector.broadcast %cst_26 : f32 to vector<40x1xf32>
    %66 = arith.addf %64, %65 : vector<40x1xf32>
    %67 = math.rsqrt %66 : vector<40x1xf32>
    %68 = vector.broadcast %67 : vector<40x1xf32> to vector<40x32xf32>
    %69 = arith.mulf %62, %68 : vector<40x32xf32>
    %70 = arith.truncf %69 : vector<40x32xf32> to vector<40x32xbf16>
    %cst_27 = arith.constant dense<0.000000e+00> : vector<40x64xf32>
    %71 = tpu.matmul %70, %2, %cst_27 {dimension_numbers = #tpu.dot_dimension_numbers<[1], [0], [0], [1], [0, 0, 1, 1], [], []>} : vector<40x32xbf16>, vector<32x64xbf16>, vector<40x64xf32> -> vector<40x64xf32>
    %72 = vector.broadcast %6 : vector<1x64xf32> to vector<40x64xf32>
    %73 = arith.addf %71, %72 : vector<40x64xf32>
    %74 = arith.mulf %73, %73 : vector<40x64xf32>
    %75 = arith.mulf %73, %74 : vector<40x64xf32>
    %cst_28 = arith.constant 4.471500e-02 : f32
    %76 = vector.broadcast %cst_28 : f32 to vector<40x64xf32>
    %77 = arith.mulf %76, %75 : vector<40x64xf32>
    %78 = arith.addf %73, %77 : vector<40x64xf32>
    %cst_29 = arith.constant 0.797884583 : f32
    %79 = vector.broadcast %cst_29 : f32 to vector<40x64xf32>
    %80 = arith.mulf %79, %78 : vector<40x64xf32>
    %81 = math.tanh %80 : vector<40x64xf32>
    %cst_30 = arith.constant 1.000000e+00 : f32
    %82 = vector.broadcast %cst_30 : f32 to vector<40x64xf32>
    %83 = arith.addf %82, %81 : vector<40x64xf32>
    %cst_31 = arith.constant 5.000000e-01 : f32
    %84 = vector.broadcast %cst_31 : f32 to vector<40x64xf32>
    %85 = arith.mulf %84, %83 : vector<40x64xf32>
    %86 = arith.mulf %73, %85 : vector<40x64xf32>
    %87 = arith.truncf %86 : vector<40x64xf32> to vector<40x64xbf16>
    %cst_32 = arith.constant dense<0.000000e+00> : vector<40x32xf32>
    %88 = tpu.matmul %87, %3, %cst_32 {dimension_numbers = #tpu.dot_dimension_numbers<[1], [0], [0], [1], [0, 0, 1, 1], [], []>} : vector<40x64xbf16>, vector<64x32xbf16>, vector<40x32xf32> -> vector<40x32xf32>
    %89 = arith.addf %51, %88 : vector<40x32xf32>
    %90 = vector.broadcast %7 : vector<1x32xf32> to vector<40x32xf32>
    %91 = arith.addf %89, %90 : vector<40x32xf32>
    %92 = vector.extract_strided_slice %91 {offsets = [0, 0], sizes = [8, 32], strides = [1, 1]} : vector<40x32xf32> to vector<8x32xf32>
    %cst_33 = arith.constant dense<0.000000e+00> : vector<8xf32>
    %93 = vector.multi_reduction <add>, %92, %cst_33 [1] : vector<8x32xf32> to vector<8xf32>
    %94 = vector.shape_cast %93 : vector<8xf32> to vector<8x1xf32>
    %cst_34 = arith.constant 3.200000e+01 : f32
    %95 = vector.broadcast %cst_34 : f32 to vector<8x1xf32>
    %96 = arith.divf %94, %95 : vector<8x1xf32>
    %97 = arith.mulf %92, %92 : vector<8x32xf32>
    %cst_35 = arith.constant dense<0.000000e+00> : vector<8xf32>
    %98 = vector.multi_reduction <add>, %97, %cst_35 [1] : vector<8x32xf32> to vector<8xf32>
    %99 = vector.shape_cast %98 : vector<8xf32> to vector<8x1xf32>
    %cst_36 = arith.constant 3.200000e+01 : f32
    %100 = vector.broadcast %cst_36 : f32 to vector<8x1xf32>
    %101 = arith.divf %99, %100 : vector<8x1xf32>
    %102 = vector.broadcast %96 : vector<8x1xf32> to vector<8x32xf32>
    %103 = arith.subf %92, %102 : vector<8x32xf32>
    %104 = arith.mulf %96, %96 : vector<8x1xf32>
    %105 = arith.subf %101, %104 : vector<8x1xf32>
    %cst_37 = arith.constant 9.99999974E-6 : f32
    %106 = vector.broadcast %cst_37 : f32 to vector<8x1xf32>
    %107 = arith.addf %105, %106 : vector<8x1xf32>
    %108 = math.rsqrt %107 : vector<8x1xf32>
    %109 = vector.broadcast %108 : vector<8x1xf32> to vector<8x32xf32>
    %110 = arith.mulf %103, %109 : vector<8x32xf32>
    %111 = arith.truncf %110 : vector<8x32xf32> to vector<8x32xbf16>
    %cst_38 = arith.constant dense<0.000000e+00> : vector<8x128xf32>
    %112 = tpu.matmul %111, %4, %cst_38 {dimension_numbers = #tpu.dot_dimension_numbers<[1], [0], [0], [1], [0, 0, 1, 1], [], []>} : vector<8x32xbf16>, vector<32x128xbf16>, vector<8x128xf32> -> vector<8x128xf32>
    %113 = vector.broadcast %8 : vector<1x128xf32> to vector<8x128xf32>
    %114 = arith.addf %112, %113 : vector<8x128xf32>
    %c0_39 = arith.constant 0 : index
    %c0_40 = arith.constant 0 : index
    %115 = vector.load %arg3[%c0_39, %c0_40] : memref<8x128xf32, #tpu.memory_space<vmem>>, vector<8x128xf32>
    tpu.vector_store %arg3[%c0_39, %c0_40], %114 {strides = array<i32>} : memref<8x128xf32, #tpu.memory_space<vmem>>, vector<8x128xf32>,
    return
  }
}

</mosaic_0001>

<llo_original>
// kernel: convformer_forward.1
$region0: #{convformer_forward.1}
  #allocation0 [shape = 'u32[]', space=smem, size = 0x4, offset = 0x4, fixed_abs, tag = 'smem constant byte address 0x4 - core index']
  #allocation1 [shape = 'u32[144,128]{1,0:T(1,128)}', space=vmem, size = 0x12000, scoped, tag = 'internal scratch']
  %s0 = inlined_call_operand.vmem [shape: bf16[40,64], index: 0, kind: input, shape index: {}]
  %s1 = inlined_call_operand.vmem [shape: bf16[224,128], index: 1, kind: input, shape index: {}]
  %s2 = inlined_call_operand.vmem [shape: f32[48,128], index: 2, kind: input, shape index: {}]
  %s3 = inlined_call_operand.vmem [shape: f32[8,128], index: 3, kind: output, shape index: {}]
  %s4 = sld [smem:[#allocation0]]
  $region22: #{convformer_forward.1} parent=0
    _
  %s6 = ssub.s32 1, %s4
  %s7 = scalar_select 0, %s6, %s4
  // Predicated region
  $region2: #{convformer_forward.1} parent=0 // pred_check
    _
  $region3: #{convformer_forward.1} parent=0 // pred_check_branch
    %9 = sbr.rel (0) target = $region5
  $region4: #{convformer_forward.1} parent=0 // pred_region
    _
  $region5: #{convformer_forward.1} parent=0 // pred_fallthru
    _
  // Predicated region
  $region6: #{convformer_forward.1} parent=0 // pred_check
    _
  $region7: #{convformer_forward.1} parent=0 // pred_check_branch
    %11 = sbr.rel (0) target = $region9
  $region8: #{convformer_forward.1} parent=0 // pred_region
    _
  $region9: #{convformer_forward.1} parent=0 // pred_fallthru
    _
  // Predicated region
  $region10: #{convformer_forward.1} parent=0 // pred_check
    _
  $region11: #{convformer_forward.1} parent=0 // pred_check_branch
    %13 = sbr.rel (0) target = $region13
  $region12: #{convformer_forward.1} parent=0 // pred_region
    _
  $region13: #{convformer_forward.1} parent=0 // pred_fallthru
    _
  %v15 = vld [vmem:[%s1] sm:$0xf]
  %v16 = vld [vmem:[%s1 + $0x4] sm:$0xf]
  %v17 = vld [vmem:[%s1 + $0x8] sm:$0xf]
  %v18 = vld [vmem:[%s1 + $0xc] sm:$0xf]
  %v19 = vld [vmem:[%s1 + $0x10] sm:$0xf]
  %v20 = vld [vmem:[%s1 + $0x14] sm:$0xf]
  %v21 = vld [vmem:[%s1 + $0x18] sm:$0xf]
  %v22 = vld [vmem:[%s1 + $0x1c] sm:$0xf]
  %v23 = vld [vmem:[%s1 + $0x20] sm:$0xf]
  %v24 = vld [vmem:[%s1 + $0x24] sm:$0xf]
  %v25 = vld [vmem:[%s1 + $0x28] sm:$0xf]
  %v26 = vld [vmem:[%s1 + $0x2c] sm:$0xf]
  %v27 = vld [vmem:[%s1 + $0x30] sm:$0xf]
  %v28 = vld [vmem:[%s1 + $0x34] sm:$0xf]
  %v29 = vld [vmem:[%s1 + $0x38] sm:$0xf]
  %v30 = vld [vmem:[%s1 + $0x3c] sm:$0xf]
  %v31 = vld [vmem:[%s1 + $0x40] sm:$0xf]
  %v32 = vld [vmem:[%s1 + $0x44] sm:$0xf]
  %v33 = vld [vmem:[%s1 + $0x48] sm:$0xf]
  %v34 = vld [vmem:[%s1 + $0x4c] sm:$0xf]
  %v35 = vld [vmem:[%s1 + $0x50] sm:$0xf]
  %v36 = vld [vmem:[%s1 + $0x54] sm:$0xf]
  %v37 = vld [vmem:[%s1 + $0x58] sm:$0xf]
  %v38 = vld [vmem:[%s1 + $0x5c] sm:$0xf]
  %v39 = vld [vmem:[%s1 + $0x60] sm:$0xf]
  %v40 = vld [vmem:[%s1 + $0x64] sm:$0xf]
  %v41 = vld [vmem:[%s1 + $0x68] sm:$0xf]
  %v42 = vld [vmem:[%s1 + $0x6c] sm:$0xf]
  %v43 = vld [vmem:[%s2] sm:$0x1]
  %v44 = vld [vmem:[%s2 + $0x1] sm:$0x1]
  %v45 = vld [vmem:[%s2 + $0x2] sm:$0x1]
  %v46 = vld [vmem:[%s2 + $0x3] sm:$0x1]
  %v47 = vld [vmem:[%s2 + $0x8] sm:$0xff]
  %v48 = vld [vmem:[%s2 + $0x10] sm:$0xff]
  %v49 = vld [vmem:[%s2 + $0x18] sm:$0xff]
  %v50 = vld [vmem:[%s2 + $0x20] sm:$0xff]
  %v51 = vld [vmem:[%s2 + $0x28] sm:$0xff]
  %v52 = vld [vmem:[%s0] sm:$0xf]
  %v53 = vld [vmem:[%s0 + $0x4] sm:$0xf]
  %v54 = vld [vmem:[%s0 + $0x8] sm:$0xf]
  %v55 = vld [vmem:[%s0 + $0xc] sm:$0xf]
  %v56 = vld [vmem:[%s0 + $0x10] sm:$0xf]
  %v62 = vunpack.c.l.b16 %v52
  %v63 = vunpack.c.l.b16 %v53
  %v64 = vunpack.c.l.b16 %v54
  %v65 = vunpack.c.l.b16 %v55
  %v66 = vunpack.c.l.b16 %v56
  %v67 = vpack.c.b16 %v63, %v62
  %v68 = vpack.c.b16 %v65, %v64
  %v69 = vpack.c.b16 %v66, %v66
  %v78 = vunpack.c.l.b16 %v15
  %v79 = vunpack.c.l.b16 %v16
  %v80 = vunpack.c.l.b16 %v17
  %v81 = vunpack.c.l.b16 %v18
  %v82 = vunpack.c.l.b16 %v19
  %v83 = vunpack.c.l.b16 %v20
  %v84 = vunpack.c.l.b16 %v21
  %v85 = vunpack.c.l.b16 %v22
  %v86 = vpack.c.b16 %v79, %v78
  %v87 = vpack.c.b16 %v81, %v80
  %v88 = vpack.c.b16 %v83, %v82
  %v89 = vpack.c.b16 %v85, %v84
  %vm94 = vcmask 523264
  %v96 = vsel %vm94, %v67, 0
  %v99 = vsel %vm94, %v68, 0
  %v102 = vsel %vm94, %v69, 0
  %104 = vmatprep.subr.bf16.mxu0 0
  %105 = vmatpush1.bf16.msra.mxu0 0
  %106 = vmatprep.subr.bf16.mxu0 0
  %107 = vmatpush1.bf16.msra.mxu0 0
  %108 = vmatprep.subr.bf16.mxu0 0
  %109 = vmatpush1.bf16.msra.mxu0 0
  %110 = vmatprep.subr.bf16.mxu0 0
  %111 = vmatpush1.bf16.msra.mxu0 0
  %112 = vmatprep.subr.bf16.mxu0 0
  %113 = vmatpush1.bf16.msra.mxu0 %v89
  %114 = vmatprep.subr.bf16.mxu0 0
  %115 = vmatpush1.bf16.msra.mxu0 %v88
  %116 = vmatprep.subr.bf16.mxu0 0
  %117 = vmatpush1.bf16.msra.mxu0 %v87
  %118 = vmatprep.subr.bf16.mxu0 0
  %119 = vmatpush1.bf16.msra.mxu0 %v86
  %120 = vmatprep.subr.bf16.mxu0 0
  %121 = vmatpush2.bf16.msra.mxu0 0
  %122 = vmatprep.subr.bf16.mxu0 0
  %123 = vmatpush2.bf16.msra.mxu0 0
  %124 = vmatprep.subr.bf16.mxu0 0
  %125 = vmatpush2.bf16.msra.mxu0 0
  %126 = vmatprep.subr.bf16.mxu0 0
  %127 = vmatpush2.bf16.msra.mxu0 0
  %128 = vmatprep.subr.bf16.mxu0 0
  %129 = vmatpush2.bf16.msra.mxu0 0
  %130 = vmatprep.subr.bf16.mxu0 0
  %131 = vmatpush2.bf16.msra.mxu0 0
  %132 = vmatprep.subr.bf16.mxu0 0
  %133 = vmatpush2.bf16.msra.mxu0 0
  %134 = vmatprep.subr.bf16.mxu0 0
  %135 = vmatpush2.bf16.msra.mxu0 0
  %136 = vmatprep.mubr.bf16.mxu0 0
  %137 = vmatmul.mubr.bf16.gmra.mxu0 %v96
  %v138 = vpop.f32.mrf.mxu0
  %v139 = vadd.f32 %v47, %v138
  %v140 = vpop.f32.mrf.mxu0
  %v141 = vpop.f32.mrf.mxu0
  %v142 = vadd.f32 %v48, %v141
  %v143 = vpop.f32.mrf.mxu0
  %144 = vmatprep.mubr.bf16.mxu0 0
  %145 = vmatmul.mubr.bf16.gmra.mxu0 %v99
  %v146 = vpop.f32.mrf.mxu0
  %v147 = vadd.f32 %v49, %v146
  %v148 = vpop.f32.mrf.mxu0
  %v149 = vpop.f32.mrf.mxu0
  %v150 = vadd.f32 %v50, %v149
  %v151 = vpop.f32.mrf.mxu0
  %152 = vmatprep.mubr.bf16.mxu0 0
  %153 = vmatmul.mubr.bf16.gmra.mxu0 %v102
  %v154 = vpop.f32.mrf.mxu0
  %v155 = vadd.f32 %v51, %v154
  %v156 = vpop.f32.mrf.mxu0
  %v157 = vpop.f32.mrf.mxu0
  %v158 = vpop.f32.mrf.mxu0
  %159 = vdwg.mxu0
  %vm160 = vcmask 261120
  %v161 = vsel %vm160, %v139, 0.0
  %162 = vadd.xlane.f32.xlu0 %v161
  %v163 = vpop.xlane.xlu0 %162
  %v164 = vsel %vm160, %v142, 0.0
  %165 = vadd.xlane.f32.xlu0 %v164
  %v166 = vpop.xlane.xlu0 %165
  %v167 = vsel %vm160, %v147, 0.0
  %168 = vadd.xlane.f32.xlu0 %v167
  %v169 = vpop.xlane.xlu0 %168
  %v170 = vsel %vm160, %v150, 0.0
  %171 = vadd.xlane.f32.xlu0 %v170
  %v172 = vpop.xlane.xlu0 %171
  %v173 = vsel %vm160, %v155, 0.0
  %174 = vadd.xlane.f32.xlu0 %v173
  %v175 = vpop.xlane.xlu0 %174
  %v176 = vrcp.pop 32.0
  %v177 = vmul.f32 %v163, %v176
  %v178 = vmul.f32 %v166, %v176
  %v179 = vmul.f32 %v169, %v176
  %v180 = vmul.f32 %v172, %v176
  %v181 = vmul.f32 %v175, %v176
  %v182 = vmul.f32 %v139, %v139
  %v183 = vmul.f32 %v142, %v142
  %v184 = vmul.f32 %v147, %v147
  %v185 = vmul.f32 %v150, %v150
  %v186 = vmul.f32 %v155, %v155
  %v187 = vsel %vm160, %v182, 0.0
  %188 = vadd.xlane.f32.xlu0 %v187
  %v189 = vpop.xlane.xlu0 %188
  %v190 = vsel %vm160, %v183, 0.0
  %191 = vadd.xlane.f32.xlu0 %v190
  %v192 = vpop.xlane.xlu0 %191
  %v193 = vsel %vm160, %v184, 0.0
  %194 = vadd.xlane.f32.xlu0 %v193
  %v195 = vpop.xlane.xlu0 %194
  %v196 = vsel %vm160, %v185, 0.0
  %197 = vadd.xlane.f32.xlu0 %v196
  %v198 = vpop.xlane.xlu0 %197
  %v199 = vsel %vm160, %v186, 0.0
  %200 = vadd.xlane.f32.xlu0 %v199
  %v201 = vpop.xlane.xlu0 %200
  %v202 = vmul.f32 %v189, %v176
  %v203 = vmul.f32 %v192, %v176
  %v204 = vmul.f32 %v195, %v176
  %v205 = vmul.f32 %v198, %v176
  %v206 = vmul.f32 %v201, %v176
  %v207 = vsub.f32 %v139, %v177
  %v208 = vsub.f32 %v142, %v178
  %v209 = vsub.f32 %v147, %v179
  %v210 = vsub.f32 %v150, %v180
  %v211 = vsub.f32 %v155, %v181
  %v212 = vmul.f32 %v177, %v177
  %v213 = vmul.f32 %v178, %v178
  %v214 = vmul.f32 %v179, %v179
  %v215 = vmul.f32 %v180, %v180
  %v216 = vmul.f32 %v181, %v181
  %v217 = vsub.f32 %v202, %v212
  %v218 = vsub.f32 %v203, %v213
  %v219 = vsub.f32 %v204, %v214
  %v220 = vsub.f32 %v205, %v215
  %v221 = vsub.f32 %v206, %v216
  %v222 = vadd.f32 %v217, 1e-05
  %v223 = vadd.f32 %v218, 1e-05
  %v224 = vadd.f32 %v219, 1e-05
  %v225 = vadd.f32 %v220, 1e-05
  %v226 = vadd.f32 %v221, 1e-05
  %v227 = vrsqrt.pop %v222
  %v228 = vrsqrt.pop %v223
  %v229 = vrsqrt.pop %v224
  %v230 = vrsqrt.pop %v225
  %v231 = vrsqrt.pop %v226
  %v232 = vmul.f32 %v207, %v227
  %v233 = vmul.f32 %v208, %v228
  %v234 = vmul.f32 %v209, %v229
  %v235 = vmul.f32 %v210, %v230
  %v236 = vmul.f32 %v211, %v231
  %v237 = vpack.c.bf16 %v233, %v232
  %v238 = vpack.c.bf16 %v235, %v234
  %v239 = vpack.c.bf16 %v236, %v236
  %v240 = vlaneseq
  %v241 = vshrl.u32 %v240, 7
  %v242 = vsub.s32 0, %v241
  %v243 = vrot.slane %v43, %v242
  %v248 = vunpack.c.l.b16 %v23
  %v249 = vunpack.c.l.b16 %v24
  %v250 = vunpack.c.l.b16 %v25
  %v251 = vunpack.c.l.b16 %v26
  %v252 = vpack.c.b16 %v249, %v248
  %v253 = vpack.c.b16 %v251, %v250
  %v257 = vsel %vm160, %v237, 0
  %v260 = vsel %vm160, %v238, 0
  %v263 = vsel %vm160, %v239, 0
  %265 = vmatprep.subr.bf16.mxu0 0
  %266 = vmatpush1.bf16.msra.mxu0 0
  %267 = vmatprep.subr.bf16.mxu0 0
  %268 = vmatpush1.bf16.msra.mxu0 0
  %269 = vmatprep.subr.bf16.mxu0 0
  %270 = vmatpush1.bf16.msra.mxu0 0
  %271 = vmatprep.subr.bf16.mxu0 0
  %272 = vmatpush1.bf16.msra.mxu0 0
  %273 = vmatprep.subr.bf16.mxu0 0
  %274 = vmatpush1.bf16.msra.mxu0 0
  %275 = vmatprep.subr.bf16.mxu0 0
  %276 = vmatpush1.bf16.msra.mxu0 0
  %277 = vmatprep.subr.bf16.mxu0 0
  %278 = vmatpush1.bf16.msra.mxu0 %v253
  %279 = vmatprep.subr.bf16.mxu0 0
  %280 = vmatpush1.bf16.msra.mxu0 %v252
  %281 = vmatprep.subr.bf16.mxu0 0
  %282 = vmatpush2.bf16.msra.mxu0 0
  %283 = vmatprep.subr.bf16.mxu0 0
  %284 = vmatpush2.bf16.msra.mxu0 0
  %285 = vmatprep.subr.bf16.mxu0 0
  %286 = vmatpush2.bf16.msra.mxu0 0
  %287 = vmatprep.subr.bf16.mxu0 0
  %288 = vmatpush2.bf16.msra.mxu0 0
  %289 = vmatprep.subr.bf16.mxu0 0
  %290 = vmatpush2.bf16.msra.mxu0 0
  %291 = vmatprep.subr.bf16.mxu0 0
  %292 = vmatpush2.bf16.msra.mxu0 0
  %293 = vmatprep.subr.bf16.mxu0 0
  %294 = vmatpush2.bf16.msra.mxu0 0
  %295 = vmatprep.subr.bf16.mxu0 0
  %296 = vmatpush2.bf16.msra.mxu0 0
  %297 = vmatprep.mubr.bf16.mxu0 0
  %298 = vmatmul.mubr.bf16.gmra.mxu0 %v257
  %v299 = vpop.f32.mrf.mxu0
  %v300 = vadd.f32 %v243, %v299
  %v301 = vpop.f32.mrf.mxu0
  %v302 = vpop.f32.mrf.mxu0
  %v303 = vadd.f32 %v243, %v302
  %v304 = vpop.f32.mrf.mxu0
  %305 = vmatprep.mubr.bf16.mxu0 0
  %306 = vmatmul.mubr.bf16.gmra.mxu0 %v260
  %v307 = vpop.f32.mrf.mxu0
  %v308 = vadd.f32 %v243, %v307
  %v309 = vpop.f32.mrf.mxu0
  %v310 = vpop.f32.mrf.mxu0
  %v311 = vadd.f32 %v243, %v310
  %v312 = vpop.f32.mrf.mxu0
  %313 = vmatprep.mubr.bf16.mxu0 0
  %314 = vmatmul.mubr.bf16.gmra.mxu0 %v263
  %v315 = vpop.f32.mrf.mxu0
  %v316 = vadd.f32 %v243, %v315
  %v317 = vpop.f32.mrf.mxu0
  %v318 = vpop.f32.mrf.mxu0
  %v319 = vpop.f32.mrf.mxu0
  %320 = vdwg.mxu0
  %v321 = vlaneseq
  %v322 = vshrl.u32 %v321, 7
  %v323 = vadd.s32 %v322, 8
  %v324 = vadd.s32 %v322, 16
  %v325 = vadd.s32 %v322, 24
  %v326 = vadd.s32 %v322, 32
  %vm327 = vcmp.ge.s32.totalorder %v322, 2
  %vm328 = vcmp.ge.s32.totalorder %v323, 2
  %vm329 = vcmp.ge.s32.totalorder %v324, 2
  %vm330 = vcmp.ge.s32.totalorder %v325, 2
  %vm331 = vcmp.ge.s32.totalorder %v326, 2
  %v332 = vrot.slane %v300, 6
  %v333 = vrot.slane %v303, 6
  %v334 = vrot.slane %v308, 6
  %v335 = vrot.slane %v311, 6
  %v336 = vrot.slane %v316, 6
  %vm337 = vcmp.lt.s32.totalorder %v322, 2
  %v338 = vsel %vm337, %v335, %v336
  %v339 = vsel %vm337, %v334, %v335
  %v340 = vsel %vm337, %v333, %v334
  %v341 = vsel %vm337, %v332, %v333
  %v342 = vsel %vm337, %v336, %v332
  %v343 = vsel %vm327, %v342, 0.0
  %v344 = vsel %vm328, %v341, 0.0
  %v345 = vsel %vm329, %v340, 0.0
  %v346 = vsel %vm330, %v339, 0.0
  %v347 = vsel %vm331, %v338, 0.0
  %vm348 = vcmp.lt.s32.totalorder %v322, 32
  %vm349 = vcmp.lt.s32.totalorder %v323, 32
  %vm350 = vcmp.lt.s32.totalorder %v324, 32
  %vm351 = vcmp.lt.s32.totalorder %v325, 32
  %vm352 = vcmp.lt.s32.totalorder %v326, 32
  %358 = vrot.lane.b32.xlu0 %v300, 64
  %v359 = vpop.permute.xlu0 %358
  %360 = vrot.lane.b32.xlu0 %v303, 64
  %v361 = vpop.permute.xlu0 %360
  %362 = vrot.lane.b32.xlu0 %v308, 64
  %v363 = vpop.permute.xlu0 %362
  %364 = vrot.lane.b32.xlu0 %v311, 64
  %v365 = vpop.permute.xlu0 %364
  %366 = vrot.lane.b32.xlu0 %v316, 64
  %v367 = vpop.permute.xlu0 %366
  %v373 = vrot.slane %v359, 2
  %v374 = vrot.slane %v361, 2
  %v375 = vrot.slane %v363, 2
  %v376 = vrot.slane %v365, 2
  %v377 = vrot.slane %v367, 2
  %vm378 = vcmp.lt.s32.totalorder %v322, 6
  %v379 = vsel %vm378, %v376, %v377
  %v380 = vsel %vm378, %v375, %v376
  %v381 = vsel %vm378, %v374, %v375
  %v382 = vsel %vm378, %v373, %v374
  %v383 = vsel %vm378, %v377, %v373
  %v384 = vsel %vm348, %v382, 0.0
  %v385 = vsel %vm349, %v381, 0.0
  %v386 = vsel %vm350, %v380, 0.0
  %v387 = vsel %vm351, %v379, 0.0
  %v388 = vsel %vm352, %v383, 0.0
  %v389 = vadd.f32 %v139, %v343
  %v390 = vadd.f32 %v142, %v344
  %v391 = vadd.f32 %v147, %v345
  %v392 = vadd.f32 %v150, %v346
  %v393 = vadd.f32 %v155, %v347
  %394 = vrot.lane.b32.xlu0 %v300, 96
  %v395 = vpop.permute.xlu0 %394
  %396 = vrot.lane.b32.xlu0 %v303, 96
  %v397 = vpop.permute.xlu0 %396
  %398 = vrot.lane.b32.xlu0 %v308, 96
  %v399 = vpop.permute.xlu0 %398
  %400 = vrot.lane.b32.xlu0 %v311, 96
  %v401 = vpop.permute.xlu0 %400
  %402 = vrot.lane.b32.xlu0 %v316, 96
  %v403 = vpop.permute.xlu0 %402
  %v409 = vadd.f32 %v389, %v395
  %v410 = vadd.f32 %v390, %v397
  %v411 = vadd.f32 %v391, %v399
  %v412 = vadd.f32 %v392, %v401
  %v413 = vadd.f32 %v393, %v403
  %v414 = vadd.f32 %v409, %v384
  %v415 = vadd.f32 %v410, %v385
  %v416 = vadd.f32 %v411, %v386
  %v417 = vadd.f32 %v412, %v387
  %v418 = vadd.f32 %v413, %v388
  %v419 = vsel %vm160, %v414, 0.0
  %420 = vadd.xlane.f32.xlu0 %v419
  %v421 = vpop.xlane.xlu0 %420
  %v422 = vsel %vm160, %v415, 0.0
  %423 = vadd.xlane.f32.xlu0 %v422
  %v424 = vpop.xlane.xlu0 %423
  %v425 = vsel %vm160, %v416, 0.0
  %426 = vadd.xlane.f32.xlu0 %v425
  %v427 = vpop.xlane.xlu0 %426
  %v428 = vsel %vm160, %v417, 0.0
  %429 = vadd.xlane.f32.xlu0 %v428
  %v430 = vpop.xlane.xlu0 %429
  %v431 = vsel %vm160, %v418, 0.0
  %432 = vadd.xlane.f32.xlu0 %v431
  %v433 = vpop.xlane.xlu0 %432
  %v434 = vmul.f32 %v421, %v176
  %v435 = vmul.f32 %v424, %v176
  %v436 = vmul.f32 %v427, %v176
  %v437 = vmul.f32 %v430, %v176
  %v438 = vmul.f32 %v433, %v176
  %v439 = vmul.f32 %v414, %v414
  %v440 = vmul.f32 %v415, %v415
  %v441 = vmul.f32 %v416, %v416
  %v442 = vmul.f32 %v417, %v417
  %v443 = vmul.f32 %v418, %v418
  %v444 = vsel %vm160, %v439, 0.0
  %445 = vadd.xlane.f32.xlu0 %v444
  %v446 = vpop.xlane.xlu0 %445
  %v447 = vsel %vm160, %v440, 0.0
  %448 = vadd.xlane.f32.xlu0 %v447
  %v449 = vpop.xlane.xlu0 %448
  %v450 = vsel %vm160, %v441, 0.0
  %451 = vadd.xlane.f32.xlu0 %v450
  %v452 = vpop.xlane.xlu0 %451
  %v453 = vsel %vm160, %v442, 0.0
  %454 = vadd.xlane.f32.xlu0 %v453
  %v455 = vpop.xlane.xlu0 %454
  %v456 = vsel %vm160, %v443, 0.0
  %457 = vadd.xlane.f32.xlu0 %v456
  %v458 = vpop.xlane.xlu0 %457
  %v459 = vmul.f32 %v446, %v176
  %v460 = vmul.f32 %v449, %v176
  %v461 = vmul.f32 %v452, %v176
  %v462 = vmul.f32 %v455, %v176
  %v463 = vmul.f32 %v458, %v176
  %v464 = vsub.f32 %v414, %v434
  %v465 = vsub.f32 %v415, %v435
  %v466 = vsub.f32 %v416, %v436
  %v467 = vsub.f32 %v417, %v437
  %v468 = vsub.f32 %v418, %v438
  %v469 = vmul.f32 %v434, %v434
  %v470 = vmul.f32 %v435, %v435
  %v471 = vmul.f32 %v436, %v436
  %v472 = vmul.f32 %v437, %v437
  %v473 = vmul.f32 %v438, %v438
  %v474 = vsub.f32 %v459, %v469
  %v475 = vsub.f32 %v460, %v470
  %v476 = vsub.f32 %v461, %v471
  %v477 = vsub.f32 %v462, %v472
  %v478 = vsub.f32 %v463, %v473
  %v479 = vadd.f32 %v474, 1e-05
  %v480 = vadd.f32 %v475, 1e-05
  %v481 = vadd.f32 %v476, 1e-05
  %v482 = vadd.f32 %v477, 1e-05
  %v483 = vadd.f32 %v478, 1e-05
  %v484 = vrsqrt.pop %v479
  %v485 = vrsqrt.pop %v480
  %v486 = vrsqrt.pop %v481
  %v487 = vrsqrt.pop %v482
  %v488 = vrsqrt.pop %v483
  %v489 = vmul.f32 %v464, %v484
  %v490 = vmul.f32 %v465, %v485
  %v491 = vmul.f32 %v466, %v486
  %v492 = vmul.f32 %v467, %v487
  %v493 = vmul.f32 %v468, %v488
  %v494 = vpack.c.bf16 %v490, %v489
  %v495 = vpack.c.bf16 %v492, %v491
  %v496 = vpack.c.bf16 %v493, %v493
  %v497 = vlaneseq
  %v498 = vshrl.u32 %v497, 7
  %v499 = vsub.s32 0, %v498
  %v500 = vrot.slane %v44, %v499
  %v505 = vunpack.c.l.b16 %v27
  %v506 = vunpack.c.l.b16 %v28
  %v507 = vunpack.c.l.b16 %v29
  %v508 = vunpack.c.l.b16 %v30
  %v509 = vpack.c.b16 %v506, %v505
  %v510 = vpack.c.b16 %v508, %v507
  %v514 = vsel %vm160, %v494, 0
  %v517 = vsel %vm160, %v495, 0
  %v520 = vsel %vm160, %v496, 0
  %522 = vmatprep.subr.bf16.mxu0 0
  %523 = vmatpush1.bf16.msra.mxu0 0
  %524 = vmatprep.subr.bf16.mxu0 0
  %525 = vmatpush1.bf16.msra.mxu0 0
  %526 = vmatprep.subr.bf16.mxu0 0
  %527 = vmatpush1.bf16.msra.mxu0 0
  %528 = vmatprep.subr.bf16.mxu0 0
  %529 = vmatpush1.bf16.msra.mxu0 0
  %530 = vmatprep.subr.bf16.mxu0 0
  %531 = vmatpush1.bf16.msra.mxu0 0
  %532 = vmatprep.subr.bf16.mxu0 0
  %533 = vmatpush1.bf16.msra.mxu0 0
  %534 = vmatprep.subr.bf16.mxu0 0
  %535 = vmatpush1.bf16.msra.mxu0 %v510
  %536 = vmatprep.subr.bf16.mxu0 0
  %537 = vmatpush1.bf16.msra.mxu0 %v509
  %538 = vmatprep.subr.bf16.mxu0 0
  %539 = vmatpush2.bf16.msra.mxu0 0
  %540 = vmatprep.subr.bf16.mxu0 0
  %541 = vmatpush2.bf16.msra.mxu0 0
  %542 = vmatprep.subr.bf16.mxu0 0
  %543 = vmatpush2.bf16.msra.mxu0 0
  %544 = vmatprep.subr.bf16.mxu0 0
  %545 = vmatpush2.bf16.msra.mxu0 0
  %546 = vmatprep.subr.bf16.mxu0 0
  %547 = vmatpush2.bf16.msra.mxu0 0
  %548 = vmatprep.subr.bf16.mxu0 0
  %549 = vmatpush2.bf16.msra.mxu0 0
  %550 = vmatprep.subr.bf16.mxu0 0
  %551 = vmatpush2.bf16.msra.mxu0 0
  %552 = vmatprep.subr.bf16.mxu0 0
  %553 = vmatpush2.bf16.msra.mxu0 0
  %554 = vmatprep.mubr.bf16.mxu0 0
  %555 = vmatmul.mubr.bf16.gmra.mxu0 %v514
  %v556 = vpop.f32.mrf.mxu0
  %v557 = vadd.f32 %v500, %v556
  %v558 = vpop.f32.mrf.mxu0
  %v559 = vpop.f32.mrf.mxu0
  %v560 = vadd.f32 %v500, %v559
  %v561 = vpop.f32.mrf.mxu0
  %562 = vmatprep.mubr.bf16.mxu0 0
  %563 = vmatmul.mubr.bf16.gmra.mxu0 %v517
  %v564 = vpop.f32.mrf.mxu0
  %v565 = vadd.f32 %v500, %v564
  %v566 = vpop.f32.mrf.mxu0
  %v567 = vpop.f32.mrf.mxu0
  %v568 = vadd.f32 %v500, %v567
  %v569 = vpop.f32.mrf.mxu0
  %570 = vmatprep.mubr.bf16.mxu0 0
  %571 = vmatmul.mubr.bf16.gmra.mxu0 %v520
  %v572 = vpop.f32.mrf.mxu0
  %v573 = vadd.f32 %v500, %v572
  %v574 = vpop.f32.mrf.mxu0
  %v575 = vpop.f32.mrf.mxu0
  %v576 = vpop.f32.mrf.mxu0
  %577 = vdwg.mxu0
  %v578 = vmul.f32 %v557, %v557
  %v579 = vmul.f32 %v560, %v560
  %v580 = vmul.f32 %v565, %v565
  %v581 = vmul.f32 %v568, %v568
  %v582 = vmul.f32 %v573, %v573
  %v583 = vmul.f32 %v557, %v578
  %v584 = vmul.f32 %v560, %v579
  %v585 = vmul.f32 %v565, %v580
  %v586 = vmul.f32 %v568, %v581
  %v587 = vmul.f32 %v573, %v582
  %v588 = vmul.f32 %v583, 0.044715
  %v589 = vmul.f32 %v584, 0.044715
  %v590 = vmul.f32 %v585, 0.044715
  %v591 = vmul.f32 %v586, 0.044715
  %v592 = vmul.f32 %v587, 0.044715
  %v593 = vadd.f32 %v557, %v588
  %v594 = vadd.f32 %v560, %v589
  %v595 = vadd.f32 %v565, %v590
  %v596 = vadd.f32 %v568, %v591
  %v597 = vadd.f32 %v573, %v592
  %v598 = vmul.f32 %v593, 0.7978846
  %v599 = vmul.f32 %v594, 0.7978846
  %v600 = vmul.f32 %v595, 0.7978846
  %v601 = vmul.f32 %v596, 0.7978846
  %v602 = vmul.f32 %v597, 0.7978846
  %v603 = vtanh.pop %v598
  %v604 = vtanh.pop %v599
  %v605 = vtanh.pop %v600
  %v606 = vtanh.pop %v601
  %v607 = vtanh.pop %v602
  %v608 = vadd.f32 %v603, 1.0
  %v609 = vadd.f32 %v604, 1.0
  %v610 = vadd.f32 %v605, 1.0
  %v611 = vadd.f32 %v606, 1.0
  %v612 = vadd.f32 %v607, 1.0
  %v613 = vmul.f32 %v608, 0.5
  %v614 = vmul.f32 %v609, 0.5
  %v615 = vmul.f32 %v610, 0.5
  %v616 = vmul.f32 %v611, 0.5
  %v617 = vmul.f32 %v612, 0.5
  %v618 = vmul.f32 %v557, %v613
  %v619 = vmul.f32 %v560, %v614
  %v620 = vmul.f32 %v565, %v615
  %v621 = vmul.f32 %v568, %v616
  %v622 = vmul.f32 %v573, %v617
  %v623 = vpack.c.bf16 %v619, %v618
  %v624 = vpack.c.bf16 %v621, %v620
  %v625 = vpack.c.bf16 %v622, %v622
  %v634 = vunpack.c.l.b16 %v31
  %v635 = vunpack.c.l.b16 %v32
  %v636 = vunpack.c.l.b16 %v33
  %v637 = vunpack.c.l.b16 %v34
  %v638 = vunpack.c.l.b16 %v35
  %v639 = vunpack.c.l.b16 %v36
  %v640 = vunpack.c.l.b16 %v37
  %v641 = vunpack.c.l.b16 %v38
  %v642 = vpack.c.b16 %v635, %v634
  %v643 = vpack.c.b16 %v637, %v636
  %v644 = vpack.c.b16 %v639, %v638
  %v645 = vpack.c.b16 %v641, %v640
  %v651 = vsel %vm94, %v623, 0
  %v654 = vsel %vm94, %v624, 0
  %v657 = vsel %vm94, %v625, 0
  %659 = vmatprep.subr.bf16.mxu0 0
  %660 = vmatpush1.bf16.msra.mxu0 0
  %661 = vmatprep.subr.bf16.mxu0 0
  %662 = vmatpush1.bf16.msra.mxu0 0
  %663 = vmatprep.subr.bf16.mxu0 0
  %664 = vmatpush1.bf16.msra.mxu0 0
  %665 = vmatprep.subr.bf16.mxu0 0
  %666 = vmatpush1.bf16.msra.mxu0 0
  %667 = vmatprep.subr.bf16.mxu0 0
  %668 = vmatpush1.bf16.msra.mxu0 %v645
  %669 = vmatprep.subr.bf16.mxu0 0
  %670 = vmatpush1.bf16.msra.mxu0 %v644
  %671 = vmatprep.subr.bf16.mxu0 0
  %672 = vmatpush1.bf16.msra.mxu0 %v643
  %673 = vmatprep.subr.bf16.mxu0 0
  %674 = vmatpush1.bf16.msra.mxu0 %v642
  %675 = vmatprep.subr.bf16.mxu0 0
  %676 = vmatpush2.bf16.msra.mxu0 0
  %677 = vmatprep.subr.bf16.mxu0 0
  %678 = vmatpush2.bf16.msra.mxu0 0
  %679 = vmatprep.subr.bf16.mxu0 0
  %680 = vmatpush2.bf16.msra.mxu0 0
  %681 = vmatprep.subr.bf16.mxu0 0
  %682 = vmatpush2.bf16.msra.mxu0 0
  %683 = vmatprep.subr.bf16.mxu0 0
  %684 = vmatpush2.bf16.msra.mxu0 0
  %685 = vmatprep.subr.bf16.mxu0 0
  %686 = vmatpush2.bf16.msra.mxu0 0
  %687 = vmatprep.subr.bf16.mxu0 0
  %688 = vmatpush2.bf16.msra.mxu0 0
  %689 = vmatprep.subr.bf16.mxu0 0
  %690 = vmatpush2.bf16.msra.mxu0 0
  %691 = vmatprep.mubr.bf16.mxu0 0
  %692 = vmatmul.mubr.bf16.gmra.mxu0 %v651
  %v693 = vpop.f32.mrf.mxu0
  %v694 = vadd.f32 0.0, %v693
  %v695 = vpop.f32.mrf.mxu0
  %v696 = vpop.f32.mrf.mxu0
  %v697 = vpop.f32.mrf.mxu0
  %698 = vmatprep.mubr.bf16.mxu0 0
  %699 = vmatmul.mubr.bf16.gmra.mxu0 %v654
  %v700 = vpop.f32.mrf.mxu0
  %v701 = vpop.f32.mrf.mxu0
  %v702 = vpop.f32.mrf.mxu0
  %v703 = vpop.f32.mrf.mxu0
  %704 = vmatprep.mubr.bf16.mxu0 0
  %705 = vmatmul.mubr.bf16.gmra.mxu0 %v657
  %v706 = vpop.f32.mrf.mxu0
  %v707 = vpop.f32.mrf.mxu0
  %v708 = vpop.f32.mrf.mxu0
  %v709 = vpop.f32.mrf.mxu0
  %710 = vdwg.mxu0
  %v711 = vadd.f32 %v414, %v694
  %v712 = vlaneseq
  %v713 = vshrl.u32 %v712, 7
  %v714 = vsub.s32 0, %v713
  %v715 = vrot.slane %v45, %v714
  %v716 = vadd.f32 %v711, %v715
  %v717 = vsel %vm160, %v716, 0.0
  %718 = vadd.xlane.f32.xlu0 %v717
  %v719 = vpop.xlane.xlu0 %718
  %v720 = vmul.f32 %v719, %v176
  %v721 = vmul.f32 %v716, %v716
  %v722 = vsel %vm160, %v721, 0.0
  %723 = vadd.xlane.f32.xlu0 %v722
  %v724 = vpop.xlane.xlu0 %723
  %v725 = vmul.f32 %v724, %v176
  %v726 = vsub.f32 %v716, %v720
  %v727 = vmul.f32 %v720, %v720
  %v728 = vsub.f32 %v725, %v727
  %v729 = vadd.f32 %v728, 1e-05
  %v730 = vrsqrt.pop %v729
  %v731 = vmul.f32 %v726, %v730
  %v732 = vpack.c.bf16 %v731, %v731
  %v733 = vlaneseq
  %v734 = vshrl.u32 %v733, 7
  %v735 = vsub.s32 0, %v734
  %v736 = vrot.slane %v46, %v735
  %v741 = vunpack.c.l.b16 %v39
  %v742 = vunpack.c.l.b16 %v40
  %v743 = vunpack.c.l.b16 %v41
  %v744 = vunpack.c.l.b16 %v42
  %v745 = vpack.c.b16 %v742, %v741
  %v746 = vpack.c.b16 %v744, %v743
  %v750 = vsel %vm160, %v732, 0
  %752 = vmatprep.subr.bf16.mxu0 0
  %753 = vmatpush1.bf16.msra.mxu0 0
  %754 = vmatprep.subr.bf16.mxu0 0
  %755 = vmatpush1.bf16.msra.mxu0 0
  %756 = vmatprep.subr.bf16.mxu0 0
  %757 = vmatpush1.bf16.msra.mxu0 0
  %758 = vmatprep.subr.bf16.mxu0 0
  %759 = vmatpush1.bf16.msra.mxu0 0
  %760 = vmatprep.subr.bf16.mxu0 0
  %761 = vmatpush1.bf16.msra.mxu0 0
  %762 = vmatprep.subr.bf16.mxu0 0
  %763 = vmatpush1.bf16.msra.mxu0 0
  %764 = vmatprep.subr.bf16.mxu0 0
  %765 = vmatpush1.bf16.msra.mxu0 %v746
  %766 = vmatprep.subr.bf16.mxu0 0
  %767 = vmatpush1.bf16.msra.mxu0 %v745
  %768 = vmatprep.subr.bf16.mxu0 0
  %769 = vmatpush2.bf16.msra.mxu0 0
  %770 = vmatprep.subr.bf16.mxu0 0
  %771 = vmatpush2.bf16.msra.mxu0 0
  %772 = vmatprep.subr.bf16.mxu0 0
  %773 = vmatpush2.bf16.msra.mxu0 0
  %774 = vmatprep.subr.bf16.mxu0 0
  %775 = vmatpush2.bf16.msra.mxu0 0
  %776 = vmatprep.subr.bf16.mxu0 0
  %777 = vmatpush2.bf16.msra.mxu0 0
  %778 = vmatprep.subr.bf16.mxu0 0
  %779 = vmatpush2.bf16.msra.mxu0 0
  %780 = vmatprep.subr.bf16.mxu0 0
  %781 = vmatpush2.bf16.msra.mxu0 0
  %782 = vmatprep.subr.bf16.mxu0 0
  %783 = vmatpush2.bf16.msra.mxu0 0
  %784 = vmatprep.mubr.bf16.mxu0 0
  %785 = vmatmul.mubr.bf16.gmra.mxu0 %v750
  %v786 = vpop.f32.mrf.mxu0
  %v787 = vadd.f32 %v736, %v786
  %v788 = vpop.f32.mrf.mxu0
  %v789 = vpop.f32.mrf.mxu0
  %v790 = vpop.f32.mrf.mxu0
  %791 = vdwg.mxu0
  %792 = vst [vmem:[%s3] sm:$0xff] %v787
  // Predicated region
  $region14: #{convformer_forward.1} parent=0 // pred_check
    _
  $region15: #{convformer_forward.1} parent=0 // pred_check_branch
    %794 = sbr.rel (0) target = $region17
  $region16: #{convformer_forward.1} parent=0 // pred_region
    _
  $region17: #{convformer_forward.1} parent=0 // pred_fallthru
    _
  // Predicated region
  $region18: #{convformer_forward.1} parent=0 // pred_check
    _
  $region19: #{convformer_forward.1} parent=0 // pred_check_branch
    %796 = sbr.rel (0) target = $region21
  $region20: #{convformer_forward.1} parent=0 // pred_region
    _
  $region21: #{convformer_forward.1} parent=0 // pred_fallthru
    _

</llo_original>
